<compile_context>
chip_gen: v6e
topology: v6e:2x2x1
jax: 0.10.0
libtpu: 0.0.40
codegen_flags: <defaults>
</compile_context>

<pallas_src>
import jax
import jax.numpy as jnp
from jax.experimental import pallas as pl
from jax.experimental.pallas import tpu as pltpu


def _round_up(x, m):
    return (x + m - 1) // m * m


def _vmem_budget():
    """Generation-aware VMEM planning budget / scoped limit (bytes)."""
    try:
        cap = pltpu.get_tpu_info().vmem_capacity_bytes
    except Exception:               # no query available -> assume v7x's 64 MiB
        cap = 64 * 1024 * 1024
    budget = min(int(cap * 0.70), 96 * 1024 * 1024)   # ~45 MiB v7x, ~90-96 MiB v5e/v6e
    limit = min(int(cap * 0.85), 110 * 1024 * 1024)   # ~54 MiB v7x, ~110 MiB v5e/v6e
    return budget, limit


def mlp_kernel(x_ref, w1_ref, b1_ref, w2_ref, b2_ref, o_ref, acc_ref):
    """One (row-tile, hidden-block) grid step of  relu(x@w1 + b1) @ w2 + b2."""
    j = pl.program_id(1)

    @pl.when(j == 0)
    def _init():
        acc_ref[...] = jnp.zeros_like(acc_ref)

    # fc1 on the MXU (compute-dtype operands, f32 accumulation); bias + ReLU
    # epilogue in f32 on the VPU.  x is downcast in-kernel (never in HBM).
    h = jnp.dot(x_ref[...].astype(w1_ref.dtype), w1_ref[...],
                preferred_element_type=jnp.float32)
    h = jnp.maximum(h + b1_ref[...].astype(jnp.float32), 0.0)
    # dropout(p=0) == identity -> nothing to do.
    # fc2 partial for this hidden block, accumulated in f32.
    acc_ref[...] += jnp.dot(h.astype(w2_ref.dtype), w2_ref[...],
                            preferred_element_type=jnp.float32)

    @pl.when(j == pl.num_programs(1) - 1)
    def _finalize():
        o_ref[...] = (acc_ref[...]
                      + b2_ref[...].astype(jnp.float32)).astype(o_ref.dtype)


def prepare_params(w1, b1, w2, b2, *, compute_dtype=jnp.bfloat16,
                   vmem_budget_bytes=None):
    """One-time weight prep (hoisted out of the per-forward path).

    Pads hidden/class dims to lane-friendly sizes, casts the MXU operands to
    `compute_dtype` (biases stay f32), and picks the hidden-dim block size:
    the full weight set stays VMEM-resident when it fits, otherwise it is
    streamed in `h_blk`-wide hidden blocks over a reduction grid axis.
    """
    F, H = w1.shape
    C = w2.shape[1]
    if vmem_budget_bytes is None:
        vmem_budget_bytes, _ = _vmem_budget()
    cbytes = jnp.dtype(compute_dtype).itemsize
    C_pad = _round_up(C, 128)
    H_lane = _round_up(H, 128)

    # Resident weights still get 2 buffers from Pallas' default double
    # buffering, so count them 2x when deciding whether they fit.
    resident_bytes = 2 * ((F * H_lane + H_lane * C_pad) * cbytes
                          + (H_lane + C_pad) * 4)
    if resident_bytes <= 0.6 * vmem_budget_bytes:
        h_blk = H_lane                          # fully resident weights
    else:
        h_blk = 512                             # stream the hidden dim
        while h_blk > 128 and (2 * (F * h_blk + h_blk * C_pad) * cbytes
                               > 0.5 * vmem_budget_bytes):
            h_blk //= 2
        # TODO(synk): if even h_blk=128 does not fit (enormous F), also tile
        # the F contraction dim over a third grid axis.
    H_pad = _round_up(H, h_blk)

    # Zero padding contributes exactly zero to the result.
    w1p = jnp.zeros((F, H_pad), compute_dtype).at[:, :H].set(
        w1.astype(compute_dtype))
    b1p = jnp.zeros((1, H_pad), jnp.float32).at[:, :H].set(
        b1.reshape(1, -1).astype(jnp.float32))
    w2p = jnp.zeros((H_pad, C_pad), compute_dtype).at[:H, :C].set(
        w2.astype(compute_dtype))
    b2p = jnp.zeros((1, C_pad), jnp.float32).at[:, :C].set(
        b2.reshape(1, -1).astype(jnp.float32))
    # TODO(synk): optional fp8 weight path (per-tensor scale) for v7x inference.
    return dict(w1=w1p, b1=b1p, w2=w2p, b2=b2p, h_blk=int(h_blk),
                dims=(F, H, C), compute_dtype=compute_dtype)


def mlp_forward(x, params, *, vmem_budget_bytes=None, vmem_limit_bytes=None):
    """x: [N, F] -> [N, C]   (relu(x @ w1 + b1) @ w2 + b2, dropout p=0)."""
    N, F = x.shape
    Fw, H, C = params["dims"]
    assert F == Fw, f"x has {F} features, params expect {Fw}"
    w1p, b1p, w2p, b2p = params["w1"], params["b1"], params["w2"], params["b2"]
    h_blk = params["h_blk"]
    H_pad, C_pad = w2p.shape
    n_h = H_pad // h_blk
    cbytes = jnp.dtype(params["compute_dtype"]).itemsize
    xbytes = jnp.dtype(x.dtype).itemsize
    out_dtype = x.dtype
    obytes = jnp.dtype(out_dtype).itemsize

    d_budget, d_limit = _vmem_budget()
    vmem_budget_bytes = d_budget if vmem_budget_bytes is None else vmem_budget_bytes
    vmem_limit_bytes = d_limit if vmem_limit_bytes is None else vmem_limit_bytes

    # --- VMEM accounting -> row-tile size ---------------------------------
    # Weight blocks, counted 2x for Pallas' default double buffering
    # (applies even to the resident, constant-index_map case).
    weight_bytes = 2 * ((F * h_blk + h_blk * C_pad) * cbytes
                        + (h_blk + C_pad) * 4)
    # Per streamed row: double-buffered x and out tiles, the f32 accumulator
    # scratch, the fc1 intermediate (f32 h plus its compute-dtype copy feeding
    # the second MXU pass) and the in-kernel compute-dtype copy of x.
    per_row = (2 * F * xbytes + 2 * C_pad * obytes + C_pad * 4
               + h_blk * (4 + cbytes) + F * cbytes)
    tile_n = (vmem_budget_bytes - weight_bytes) // max(per_row, 1)
    tile_n = int(max(8, min(tile_n, 1024)))
    tile_n = (tile_n // 128) * 128 if tile_n >= 128 else (tile_n // 8) * 8
    if tile_n >= N:
        tile_n = N                    # one full-extent row tile (always legal)
    if N >= 16 and pl.cdiv(N, tile_n) < 2:
        # v7x megacore: make sure both TensorCores get at least one row tile.
        tile_n = min(N, _round_up(-(-N // 2), 8))

    grid = (pl.cdiv(N, tile_n), n_h)

    weight_passes = 1 if n_h == 1 else grid[0]
    cost = pl.CostEstimate(
        flops=2 * N * (F * H_pad + H_pad * C_pad),
        transcendentals=0,
        bytes_accessed=int(N * F * xbytes + N * C_pad * obytes
                           + weight_passes * ((w1p.size + w2p.size) * cbytes
                                              + (b1p.size + b2p.size) * 4)),
    )

    out_padded = pl.pallas_call(
        mlp_kernel,
        out_shape=jax.ShapeDtypeStruct((N, C_pad), out_dtype),
        grid_spec=pltpu.PrefetchScalarGridSpec(
            num_scalar_prefetch=0,
            grid=grid,
            in_specs=[
                # x: streamed row tile, constant over the hidden axis.
                pl.BlockSpec((tile_n, F), lambda i, j: (i, 0)),
                # weights / biases: resident when n_h == 1 (constant index ->
                # fetched once), otherwise streamed hidden blocks.
                pl.BlockSpec((F, h_blk), lambda i, j: (0, j)),
                pl.BlockSpec((1, h_blk), lambda i, j: (0, j)),
                pl.BlockSpec((h_blk, C_pad), lambda i, j: (j, 0)),
                pl.BlockSpec((1, C_pad), lambda i, j: (0, 0)),
            ],
            out_specs=pl.BlockSpec((tile_n, C_pad), lambda i, j: (i, 0)),
            scratch_shapes=[pltpu.VMEM((tile_n, C_pad), jnp.float32)],
        ),
        compiler_params=pltpu.CompilerParams(
            # independent row tiles; hidden-dim reduction axis last.
            dimension_semantics=("parallel", "arbitrary"),
            vmem_limit_bytes=int(vmem_limit_bytes),
        ),
        cost_estimate=cost,
    )(x, w1p, b1p, w2p, b2p)

    # Padded output columns are exactly zero contributions; slice them off.
    return out_padded[:, :C]


def mlp_module_forward(x, edge_index, params):
    """Mirrors MLP.forward(x, edge_index); edge_index is unused by the module."""
    del edge_index
    return mlp_forward(x, params)


def init_params(key, num_features, hidden_size, num_classes):
    """nn.Linear-style uniform(-1/sqrt(fan_in), +1/sqrt(fan_in)) init.
    Weights are stored pre-transposed as [in, out]."""
    k1, k2, k3, k4 = jax.random.split(key, 4)
    bound1 = 1.0 / jnp.sqrt(num_features)
    bound2 = 1.0 / jnp.sqrt(hidden_size)
    w1 = jax.random.uniform(k1, (num_features, hidden_size), jnp.float32,
                            -bound1, bound1)
    b1 = jax.random.uniform(k2, (hidden_size,), jnp.float32, -bound1, bound1)
    w2 = jax.random.uniform(k3, (hidden_size, num_classes), jnp.float32,
                            -bound2, bound2)
    b2 = jax.random.uniform(k4, (num_classes,), jnp.float32, -bound2, bound2)
    return w1, b1, w2, b2


if __name__ == "__main__":
    key = jax.random.PRNGKey(0)
    kx, kp, kx2, kp2 = jax.random.split(key, 4)

    # --- small shapes consistent with the module (N nodes, features, hidden) --
    N, num_features, hidden_size, num_classes = 8, 16, 32, 2
    x = jax.random.normal(kx, (N, num_features), jnp.float32)
    w1, b1, w2, b2 = init_params(kp, num_features, hidden_size, num_classes)
    edge_index = jnp.zeros((2, 0), jnp.int32)        # unused by MLP.forward
    ref = jnp.maximum(x @ w1 + b1, 0.0) @ w2 + b2

    # exact path: f32 MXU operands (resident weights, single row tile)
    p_f32 = prepare_params(w1, b1, w2, b2, compute_dtype=jnp.float32)
    out_f32 = jax.block_until_ready(mlp_module_forward(x, edge_index, p_f32))
    assert out_f32.shape == (N, num_classes)
    assert jnp.allclose(out_f32, ref, atol=1e-4, rtol=1e-4), "f32 path mismatch"

    # default path: bf16 MXU operands, f32 accumulation/epilogue
    p_bf16 = prepare_params(w1, b1, w2, b2)
    out_bf16 = jax.block_until_ready(mlp_module_forward(x, edge_index, p_bf16))
    assert out_bf16.shape == (N, num_classes)
    assert jnp.allclose(out_bf16, ref, atol=5e-2, rtol=5e-2), "bf16 path mismatch"

    # --- larger, unaligned shapes exercising the H-streamed accumulator path
    # (tiny budget forces the streamed-weights fallback) and ragged row tiles.
    N2, F2, H2, C2 = 50, 200, 1000, 10
    x2 = jax.random.normal(kx2, (N2, F2), jnp.float32)
    w1b, b1b, w2b, b2b = init_params(kp2, F2, H2, C2)
    ref2 = jnp.maximum(x2 @ w1b + b1b, 0.0) @ w2b + b2b
    p_stream = prepare_params(w1b, b1b, w2b, b2b, compute_dtype=jnp.float32,
                              vmem_budget_bytes=1 << 20)
    assert p_stream["w1"].shape[1] // p_stream["h_blk"] > 1   # really streamed
    out2 = jax.block_until_ready(mlp_forward(x2, p_stream))
    assert out2.shape == (N2, C2)
    assert jnp.allclose(out2, ref2, atol=2e-3, rtol=2e-3), "streamed path mismatch"

    print("KERNEL_OK")
</pallas_src>

<mosaic_0001>
module attributes {stable_mosaic.version = 11 : i64} {
  func.func @mlp_kernel(%arg0: i32, %arg1: i32, %arg2: memref<8x16xf32, #tpu.memory_space<vmem>>, %arg3: memref<16x128xf32, #tpu.memory_space<vmem>>, %arg4: memref<1x128xf32, #tpu.memory_space<vmem>>, %arg5: memref<128x128xf32, #tpu.memory_space<vmem>>, %arg6: memref<1x128xf32, #tpu.memory_space<vmem>>, %arg7: memref<8x128xf32, #tpu.memory_space<vmem>>, %arg8: memref<8x128xf32, #tpu.memory_space<vmem>>) attributes {dimension_semantics = [#tpu.dimension_semantics<parallel>, #tpu.dimension_semantics<arbitrary>], iteration_bounds = array<i64: 1, 1>, scalar_prefetch = 0 : i64, scratch_operands = 1 : i64, tpu.core_type = #tpu.core_type<tc>, window_params = [{transform_indices = @transform_0, window_bounds = array<i64: 8, 16>}, {transform_indices = @transform_1, window_bounds = array<i64: 16, 128>}, {transform_indices = @transform_2, window_bounds = array<i64: 1, 128>}, {transform_indices = @transform_3, window_bounds = array<i64: 128, 128>}, {pipeline_mode = #tpu.pipeline_mode<synchronous>, transform_indices = @transform_4, window_bounds = array<i64: 1, 128>}, {transform_indices = @transform_5, window_bounds = array<i64: 8, 128>}]} {
    %c0_i32 = arith.constant 0 : i32
    %0 = arith.cmpi eq, %arg1, %c0_i32 : i32
    %1 = arith.extui %0 : i1 to i32
    %c0_i32_0 = arith.constant 0 : i32
    %2 = arith.cmpi ne, %1, %c0_i32_0 : i32
    scf.if %2 {
      %cst_16 = arith.constant 0.000000e+00 : f32
      %19 = vector.broadcast %cst_16 : f32 to vector<8x128xf32>
      %c0_17 = arith.constant 0 : index
      %c0_18 = arith.constant 0 : index
      %20 = vector.load %arg8[%c0_17, %c0_18] : memref<8x128xf32, #tpu.memory_space<vmem>>, vector<8x128xf32>
      tpu.vector_store %arg8[%c0_17, %c0_18], %19 {strides = array<i32>} : memref<8x128xf32, #tpu.memory_space<vmem>>, vector<8x128xf32>,
    } else {
    }
    %c0 = arith.constant 0 : index
    %c0_1 = arith.constant 0 : index
    %3 = vector.load %arg2[%c0, %c0_1] : memref<8x16xf32, #tpu.memory_space<vmem>>, vector<8x16xf32>
    %c0_2 = arith.constant 0 : index
    %c0_3 = arith.constant 0 : index
    %4 = vector.load %arg3[%c0_2, %c0_3] : memref<16x128xf32, #tpu.memory_space<vmem>>, vector<16x128xf32>
    %cst = arith.constant dense<0.000000e+00> : vector<8x128xf32>
    %5 = tpu.matmul %3, %4, %cst {dimension_numbers = #tpu.dot_dimension_numbers<[1], [0], [0], [1], [0, 0, 1, 1], [], []>} : vector<8x16xf32>, vector<16x128xf32>, vector<8x128xf32> -> vector<8x128xf32>
    %c0_4 = arith.constant 0 : index
    %c0_5 = arith.constant 0 : index
    %6 = vector.load %arg4[%c0_4, %c0_5] : memref<1x128xf32, #tpu.memory_space<vmem>>, vector<1x128xf32>
    %7 = vector.broadcast %6 : vector<1x128xf32> to vector<8x128xf32>
    %8 = arith.addf %5, %7 : vector<8x128xf32>
    %cst_6 = arith.constant 0.000000e+00 : f32
    %9 = vector.broadcast %cst_6 : f32 to vector<8x128xf32>
    %10 = arith.maximumf %8, %9 : vector<8x128xf32>
    %c0_7 = arith.constant 0 : index
    %c0_8 = arith.constant 0 : index
    %11 = vector.load %arg8[%c0_7, %c0_8] : memref<8x128xf32, #tpu.memory_space<vmem>>, vector<8x128xf32>
    %c0_9 = arith.constant 0 : index
    %c0_10 = arith.constant 0 : index
    %12 = vector.load %arg5[%c0_9, %c0_10] : memref<128x128xf32, #tpu.memory_space<vmem>>, vector<128x128xf32>
    %cst_11 = arith.constant dense<0.000000e+00> : vector<8x128xf32>
    %13 = tpu.matmul %10, %12, %cst_11 {dimension_numbers = #tpu.dot_dimension_numbers<[1], [0], [0], [1], [0, 0, 1, 1], [], []>} : vector<8x128xf32>, vector<128x128xf32>, vector<8x128xf32> -> vector<8x128xf32>
    %14 = arith.addf %11, %13 : vector<8x128xf32>
    %c0_12 = arith.constant 0 : index
    %c0_13 = arith.constant 0 : index
    %15 = vector.load %arg8[%c0_12, %c0_13] : memref<8x128xf32, #tpu.memory_space<vmem>>, vector<8x128xf32>
    tpu.vector_store %arg8[%c0_12, %c0_13], %14 {strides = array<i32>} : memref<8x128xf32, #tpu.memory_space<vmem>>, vector<8x128xf32>,
    %c0_i32_14 = arith.constant 0 : i32
    %16 = arith.cmpi eq, %arg1, %c0_i32_14 : i32
    %17 = arith.extui %16 : i1 to i32
    %c0_i32_15 = arith.constant 0 : i32
    %18 = arith.cmpi ne, %17, %c0_i32_15 : i32
    scf.if %18 {
      %c0_16 = arith.constant 0 : index
      %c0_17 = arith.constant 0 : index
      %19 = vector.load %arg8[%c0_16, %c0_17] : memref<8x128xf32, #tpu.memory_space<vmem>>, vector<8x128xf32>
      %c0_18 = arith.constant 0 : index
      %c0_19 = arith.constant 0 : index
      %20 = vector.load %arg6[%c0_18, %c0_19] : memref<1x128xf32, #tpu.memory_space<vmem>>, vector<1x128xf32>
      %21 = vector.broadcast %20 : vector<1x128xf32> to vector<8x128xf32>
      %22 = arith.addf %19, %21 : vector<8x128xf32>
      %c0_20 = arith.constant 0 : index
      %c0_21 = arith.constant 0 : index
      %23 = vector.load %arg7[%c0_20, %c0_21] : memref<8x128xf32, #tpu.memory_space<vmem>>, vector<8x128xf32>
      tpu.vector_store %arg7[%c0_20, %c0_21], %22 {strides = array<i32>} : memref<8x128xf32, #tpu.memory_space<vmem>>, vector<8x128xf32>,
    } else {
    }
    return
  }
  func.func @transform_0(%arg0: i32, %arg1: i32) -> (i32, i32) {
    %c0_i32 = arith.constant 0 : i32
    %c0_i32_0 = arith.constant 0 : i32
    return %arg0, %c0_i32 : i32, i32
  }
  func.func @transform_1(%arg0: i32, %arg1: i32) -> (i32, i32) {
    %c0_i32 = arith.constant 0 : i32
    %c0_i32_0 = arith.constant 0 : i32
    return %c0_i32, %arg1 : i32, i32
  }
  func.func @transform_2(%arg0: i32, %arg1: i32) -> (i32, i32) {
    %c0_i32 = arith.constant 0 : i32
    %c0_i32_0 = arith.constant 0 : i32
    return %c0_i32, %arg1 : i32, i32
  }
  func.func @transform_3(%arg0: i32, %arg1: i32) -> (i32, i32) {
    %c0_i32 = arith.constant 0 : i32
    %c0_i32_0 = arith.constant 0 : i32
    return %arg1, %c0_i32 : i32, i32
  }
  func.func @transform_4(%arg0: i32, %arg1: i32) -> (i32, i32) {
    %c0_i32 = arith.constant 0 : i32
    %c0_i32_0 = arith.constant 0 : i32
    %c0_i32_1 = arith.constant 0 : i32
    return %c0_i32, %c0_i32_0 : i32, i32
  }
  func.func @transform_5(%arg0: i32, %arg1: i32) -> (i32, i32) {
    %c0_i32 = arith.constant 0 : i32
    %c0_i32_0 = arith.constant 0 : i32
    return %arg0, %c0_i32 : i32, i32
  }
}

</mosaic_0001>

<llo_original>
// kernel: tpu_custom_call.1
$region0: #{tpu_custom_call.1}
  #allocation0 [shape = 'u32[]', space=smem, size = 0x4, offset = 0x4, fixed_abs, tag = 'smem constant byte address 0x4 - core index']
  #allocation1 [shape = 'u32[144,128]{1,0:T(1,128)}', space=vmem, size = 0x12000, scoped, tag = 'internal scratch']
  #allocation2 [shape = 'f32[8,128]{1,0:T(8,128)}', space=vmem, size = 0x1000, scoped, tag = 'scratch operand']
  %s0 = inlined_call_operand.hbm [shape: f32[8,16], index: 0, kind: input, shape index: {}]
  %s1 = inlined_call_operand.hbm [shape: f32[16,128], index: 1, kind: input, shape index: {}]
  %s2 = inlined_call_operand.vmem [shape: f32[1,128], index: 2, kind: input, shape index: {}]
  %s3 = inlined_call_operand.hbm [shape: f32[128,128], index: 3, kind: input, shape index: {}]
  %s4 = inlined_call_operand.vmem [shape: f32[1,128], index: 4, kind: input, shape index: {}]
  %s5 = inlined_call_operand.hbm [shape: f32[8,128], index: 5, kind: output, shape index: {}]
  %s6 = sld [smem:[#allocation0]]
  $region50: #{tpu_custom_call.1} parent=0
    _
  %s8 = ssub.s32 1, %s6
  %s9 = scalar_select 0, %s8, %s6
  $region1: #{tpu_custom_call.1} parent=0
    #allocation3 [shape = 'u8[4096]{0}', space=vmem, size = 0x1000, scoped, tag = 'input window, operand 0, single buffered']
    #allocation4 [shape = 's32[1]{0}', space=sflag, size = 0x4, scoped, tag = 'scoped memory for tpu_custom_call.1']
    #allocation5 [shape = 's32[1]{0}', space=sflag, size = 0x4, scoped, tag = 'scoped memory for tpu_custom_call.1']
    #allocation6 [shape = 'u8[8192]{0}', space=vmem, size = 0x2000, scoped, tag = 'input window, operand 1, single buffered']
    #allocation7 [shape = 's32[1]{0}', space=sflag, size = 0x4, scoped, tag = 'scoped memory for tpu_custom_call.1']
    #allocation8 [shape = 'u8[65536]{0}', space=vmem, size = 0x10000, scoped, tag = 'input window, operand 3, single buffered']
    #allocation9 [shape = 'u8[4096]{0}', space=vmem, size = 0x1000, scoped, tag = 'output window, operand 0, single buffered']
    %10 = vsyncpa [#allocation4], 0
    %11 = vsyncpa [#allocation7], 0
    %12 = vsyncpa [#allocation5], 0
    // Predicated region
    $region2: #{tpu_custom_call.1} parent=1 // pred_check
      _
    $region3: #{tpu_custom_call.1} parent=1 // pred_check_branch
      %14 = sbr.rel (0) target = $region5
    $region4: #{tpu_custom_call.1} parent=1 // pred_region
      %s16 = ssub.s32 128, 128
      %17 = vsyncadd [#allocation4], %s16
      %s19 = sshll.u32 [#allocation3], 4
      %s20 = int_to_ptr.vmem [resolvable:$true] %s19
      %22 = dma.hbm_to_vmem [thread:$0]  %s0, 128, %s20, [#allocation4]
    $region5: #{tpu_custom_call.1} parent=1 // pred_fallthru
      _
    // Predicated region
    $region6: #{tpu_custom_call.1} parent=1 // pred_check
      _
    $region7: #{tpu_custom_call.1} parent=1 // pred_check_branch
      %24 = sbr.rel (0) target = $region9
    $region8: #{tpu_custom_call.1} parent=1 // pred_region
      %s26 = ssub.s32 256, 256
      %27 = vsyncadd [#allocation7], %s26
      %s28 = sshll.u32 [#allocation6], 4
      %s29 = int_to_ptr.vmem [resolvable:$true] %s28
      %34 = dma.hbm_to_vmem [thread:$0]  %s1, 256, %s29, [#allocation7], 128, 128, 8
    $region9: #{tpu_custom_call.1} parent=1 // pred_fallthru
      _
    // Predicated region
    $region10: #{tpu_custom_call.1} parent=1 // pred_check
      _
    $region11: #{tpu_custom_call.1} parent=1 // pred_check_branch
      %36 = sbr.rel (0) target = $region13
    $region12: #{tpu_custom_call.1} parent=1 // pred_region
      _
    $region13: #{tpu_custom_call.1} parent=1 // pred_fallthru
      _
    // Predicated region
    $region14: #{tpu_custom_call.1} parent=1 // pred_check
      _
    $region15: #{tpu_custom_call.1} parent=1 // pred_check_branch
      %38 = sbr.rel (0) target = $region17
    $region16: #{tpu_custom_call.1} parent=1 // pred_region
      %s40 = ssub.s32 2048, 2048
      %41 = vsyncadd [#allocation7], %s40
      %s42 = sshll.u32 [#allocation8], 4
      %s43 = int_to_ptr.vmem [resolvable:$true] %s42
      %48 = dma.hbm_to_vmem [thread:$0]  %s3, 2048, %s43, [#allocation7], 128, 128, 8
    $region17: #{tpu_custom_call.1} parent=1 // pred_fallthru
      _
    // Predicated region
    $region18: #{tpu_custom_call.1} parent=1 // pred_check
      _
    $region19: #{tpu_custom_call.1} parent=1 // pred_check_branch
      %50 = sbr.rel (0) target = $region21
    $region20: #{tpu_custom_call.1} parent=1 // pred_region
      _
    $region21: #{tpu_custom_call.1} parent=1 // pred_fallthru
      _
    // Predicated region
    $region22: #{tpu_custom_call.1} parent=1 // pred_check
      _
    $region23: #{tpu_custom_call.1} parent=1 // pred_check_branch
      %52 = sbr.rel (0) target = $region25
    $region24: #{tpu_custom_call.1} parent=1 // pred_region
      %53 = dma.done [#allocation4], 128
    $region25: #{tpu_custom_call.1} parent=1 // pred_fallthru
      _
    // Predicated region
    $region26: #{tpu_custom_call.1} parent=1 // pred_check
      _
    $region27: #{tpu_custom_call.1} parent=1 // pred_check_branch
      %55 = sbr.rel (0) target = $region29
    $region28: #{tpu_custom_call.1} parent=1 // pred_region
      %56 = dma.done [#allocation7], 256
    $region29: #{tpu_custom_call.1} parent=1 // pred_fallthru
      _
    // Predicated region
    $region30: #{tpu_custom_call.1} parent=1 // pred_check
      _
    $region31: #{tpu_custom_call.1} parent=1 // pred_check_branch
      %58 = sbr.rel (0) target = $region33
    $region32: #{tpu_custom_call.1} parent=1 // pred_region
      %59 = dma.done [#allocation7], 2048
    $region33: #{tpu_custom_call.1} parent=1 // pred_fallthru
      _
    %p60 = scmp.eq.s32.totalorder 0, 0
    // Predicated region
    $region34: #{tpu_custom_call.1} parent=1 // pred_check
      %p61 = pneg %p60
    $region35: #{tpu_custom_call.1} parent=1 // pred_check_branch
      %63 = sbr.rel (%p61) target = $region37
    $region36: #{tpu_custom_call.1} parent=1 // pred_region
      %64 = vst [vmem:[#allocation2] sm:$0xff] 0.0
    $region37: #{tpu_custom_call.1} parent=1 // pred_fallthru
      _
    %v65 = vld [vmem:[#allocation3] sm:$0xff]
    %v66 = vld [vmem:[#allocation6] sm:$0xff]
    %v67 = vld [vmem:[#allocation6 + $0x8] sm:$0xff]
    %v68 = vld [vmem:[%s2] sm:$0x1]
    %v70 = vlaneseq
    %v71 = vshrl.u32 %v70, 7
    %v72 = vsub.s32 0, %v71
    %v73 = vrot.slane %v68, %v72
    %vm75 = vcmask 130048
    %v77 = vsel %vm75, %v65, 0
    %79 = vmatprep.subr.mxu0 0.0
    %80 = vmatpush1.msra.mxu0 0.0
    %81 = vmatprep.subr.mxu0 0.0
    %82 = vmatpush1.msra.mxu0 0.0
    %83 = vmatprep.subr.mxu0 0.0
    %84 = vmatpush1.msra.mxu0 0.0
    %85 = vmatprep.subr.mxu0 0.0
    %86 = vmatpush1.msra.mxu0 0.0
    %87 = vmatprep.subr.mxu0 0.0
    %88 = vmatpush1.msra.mxu0 0.0
    %89 = vmatprep.subr.mxu0 0.0
    %90 = vmatpush1.msra.mxu0 0.0
    %91 = vmatprep.subr.mxu0 0.0
    %92 = vmatpush1.msra.mxu0 0.0
    %93 = vmatprep.subr.mxu0 0.0
    %94 = vmatpush1.msra.mxu0 0.0
    %95 = vmatprep.subr.mxu0 0.0
    %96 = vmatpush1.msra.mxu0 0.0
    %97 = vmatprep.subr.mxu0 0.0
    %98 = vmatpush1.msra.mxu0 0.0
    %99 = vmatprep.subr.mxu0 0.0
    %100 = vmatpush1.msra.mxu0 0.0
    %101 = vmatprep.subr.mxu0 0.0
    %102 = vmatpush1.msra.mxu0 0.0
    %103 = vmatprep.subr.mxu0 0.0
    %104 = vmatpush1.msra.mxu0 0.0
    %105 = vmatprep.subr.mxu0 0.0
    %106 = vmatpush1.msra.mxu0 0.0
    %107 = vmatprep.subr.mxu0 0.0
    %108 = vmatpush1.msra.mxu0 %v67
    %109 = vmatprep.subr.mxu0 0.0
    %110 = vmatpush1.msra.mxu0 %v66
    %111 = vmatprep.subr.mxu0 0.0
    %112 = vmatpush2.msra.mxu0 0.0
    %113 = vmatprep.subr.mxu0 0.0
    %114 = vmatpush2.msra.mxu0 0.0
    %115 = vmatprep.subr.mxu0 0.0
    %116 = vmatpush2.msra.mxu0 0.0
    %117 = vmatprep.subr.mxu0 0.0
    %118 = vmatpush2.msra.mxu0 0.0
    %119 = vmatprep.subr.mxu0 0.0
    %120 = vmatpush2.msra.mxu0 0.0
    %121 = vmatprep.subr.mxu0 0.0
    %122 = vmatpush2.msra.mxu0 0.0
    %123 = vmatprep.subr.mxu0 0.0
    %124 = vmatpush2.msra.mxu0 0.0
    %125 = vmatprep.subr.mxu0 0.0
    %126 = vmatpush2.msra.mxu0 0.0
    %127 = vmatprep.subr.mxu0 0.0
    %128 = vmatpush2.msra.mxu0 0.0
    %129 = vmatprep.subr.mxu0 0.0
    %130 = vmatpush2.msra.mxu0 0.0
    %131 = vmatprep.subr.mxu0 0.0
    %132 = vmatpush2.msra.mxu0 0.0
    %133 = vmatprep.subr.mxu0 0.0
    %134 = vmatpush2.msra.mxu0 0.0
    %135 = vmatprep.subr.mxu0 0.0
    %136 = vmatpush2.msra.mxu0 0.0
    %137 = vmatprep.subr.mxu0 0.0
    %138 = vmatpush2.msra.mxu0 0.0
    %139 = vmatprep.subr.mxu0 0.0
    %140 = vmatpush2.msra.mxu0 0.0
    %141 = vmatprep.subr.mxu0 0.0
    %142 = vmatpush2.msra.mxu0 0.0
    %143 = vmatprep.mubr.f32.mxu0 0.0
    %144 = vmatmul.mubr.f32.gmra.mxu0 %v77
    %v145 = vpop.f32.mrf.mxu0
    %v146 = vadd.f32 %v73, %v145
    %v147 = vpop.f32.mrf.mxu0
    %148 = vdwg.mxu0
    %v149 = vmax.f32 %v146, 0.0
    %v150 = vld [vmem:[#allocation2] sm:$0xff]
    %v151 = vld [vmem:[#allocation8] sm:$0xff]
    %v152 = vld [vmem:[#allocation8 + $0x8] sm:$0xff]
    %v153 = vld [vmem:[#allocation8 + $0x10] sm:$0xff]
    %v154 = vld [vmem:[#allocation8 + $0x18] sm:$0xff]
    %v155 = vld [vmem:[#allocation8 + $0x20] sm:$0xff]
    %v156 = vld [vmem:[#allocation8 + $0x28] sm:$0xff]
    %v157 = vld [vmem:[#allocation8 + $0x30] sm:$0xff]
    %v158 = vld [vmem:[#allocation8 + $0x38] sm:$0xff]
    %v159 = vld [vmem:[#allocation8 + $0x40] sm:$0xff]
    %v160 = vld [vmem:[#allocation8 + $0x48] sm:$0xff]
    %v161 = vld [vmem:[#allocation8 + $0x50] sm:$0xff]
    %v162 = vld [vmem:[#allocation8 + $0x58] sm:$0xff]
    %v163 = vld [vmem:[#allocation8 + $0x60] sm:$0xff]
    %v164 = vld [vmem:[#allocation8 + $0x68] sm:$0xff]
    %v165 = vld [vmem:[#allocation8 + $0x70] sm:$0xff]
    %v166 = vld [vmem:[#allocation8 + $0x78] sm:$0xff]
    %167 = vmatprep.subr.mxu0 0.0
    %168 = vmatpush1.msra.mxu0 %v166
    %169 = vmatprep.subr.mxu0 0.0
    %170 = vmatpush1.msra.mxu0 %v165
    %171 = vmatprep.subr.mxu0 0.0
    %172 = vmatpush1.msra.mxu0 %v164
    %173 = vmatprep.subr.mxu0 0.0
    %174 = vmatpush1.msra.mxu0 %v163
    %175 = vmatprep.subr.mxu0 0.0
    %176 = vmatpush1.msra.mxu0 %v162
    %177 = vmatprep.subr.mxu0 0.0
    %178 = vmatpush1.msra.mxu0 %v161
    %179 = vmatprep.subr.mxu0 0.0
    %180 = vmatpush1.msra.mxu0 %v160
    %181 = vmatprep.subr.mxu0 0.0
    %182 = vmatpush1.msra.mxu0 %v159
    %183 = vmatprep.subr.mxu0 0.0
    %184 = vmatpush1.msra.mxu0 %v158
    %185 = vmatprep.subr.mxu0 0.0
    %186 = vmatpush1.msra.mxu0 %v157
    %187 = vmatprep.subr.mxu0 0.0
    %188 = vmatpush1.msra.mxu0 %v156
    %189 = vmatprep.subr.mxu0 0.0
    %190 = vmatpush1.msra.mxu0 %v155
    %191 = vmatprep.subr.mxu0 0.0
    %192 = vmatpush1.msra.mxu0 %v154
    %193 = vmatprep.subr.mxu0 0.0
    %194 = vmatpush1.msra.mxu0 %v153
    %195 = vmatprep.subr.mxu0 0.0
    %196 = vmatpush1.msra.mxu0 %v152
    %197 = vmatprep.subr.mxu0 0.0
    %198 = vmatpush1.msra.mxu0 %v151
    %199 = vmatprep.subr.mxu0 0.0
    %200 = vmatpush2.msra.mxu0 0.0
    %201 = vmatprep.subr.mxu0 0.0
    %202 = vmatpush2.msra.mxu0 0.0
    %203 = vmatprep.subr.mxu0 0.0
    %204 = vmatpush2.msra.mxu0 0.0
    %205 = vmatprep.subr.mxu0 0.0
    %206 = vmatpush2.msra.mxu0 0.0
    %207 = vmatprep.subr.mxu0 0.0
    %208 = vmatpush2.msra.mxu0 0.0
    %209 = vmatprep.subr.mxu0 0.0
    %210 = vmatpush2.msra.mxu0 0.0
    %211 = vmatprep.subr.mxu0 0.0
    %212 = vmatpush2.msra.mxu0 0.0
    %213 = vmatprep.subr.mxu0 0.0
    %214 = vmatpush2.msra.mxu0 0.0
    %215 = vmatprep.subr.mxu0 0.0
    %216 = vmatpush2.msra.mxu0 0.0
    %217 = vmatprep.subr.mxu0 0.0
    %218 = vmatpush2.msra.mxu0 0.0
    %219 = vmatprep.subr.mxu0 0.0
    %220 = vmatpush2.msra.mxu0 0.0
    %221 = vmatprep.subr.mxu0 0.0
    %222 = vmatpush2.msra.mxu0 0.0
    %223 = vmatprep.subr.mxu0 0.0
    %224 = vmatpush2.msra.mxu0 0.0
    %225 = vmatprep.subr.mxu0 0.0
    %226 = vmatpush2.msra.mxu0 0.0
    %227 = vmatprep.subr.mxu0 0.0
    %228 = vmatpush2.msra.mxu0 0.0
    %229 = vmatprep.subr.mxu0 0.0
    %230 = vmatpush2.msra.mxu0 0.0
    %231 = vmatprep.mubr.f32.mxu0 0.0
    %232 = vmatmul.mubr.f32.gmra.mxu0 %v149
    %v233 = vpop.f32.mrf.mxu0
    %v234 = vadd.f32 0.0, %v233
    %v235 = vpop.f32.mrf.mxu0
    %236 = vdwg.mxu0
    %v237 = vadd.f32 %v150, %v234
    %238 = vst [vmem:[#allocation2] sm:$0xff] %v237
    // Predicated region
    $region38: #{tpu_custom_call.1} parent=1 // pred_check
      %p239 = pneg %p60
    $region39: #{tpu_custom_call.1} parent=1 // pred_check_branch
      %241 = sbr.rel (%p239) target = $region41
    $region40: #{tpu_custom_call.1} parent=1 // pred_region
      %v242 = vld [vmem:[#allocation2] sm:$0xff]
      %v243 = vld [vmem:[%s4] sm:$0x1]
      %v245 = vlaneseq
      %v246 = vshrl.u32 %v245, 7
      %v247 = vsub.s32 0, %v246
      %v248 = vrot.slane %v243, %v247
      %v250 = vadd.f32 %v242, %v248
      %251 = vst [vmem:[#allocation9] sm:$0xff] %v250
    $region41: #{tpu_custom_call.1} parent=1 // pred_fallthru
      _
    // Predicated region
    $region42: #{tpu_custom_call.1} parent=1 // pred_check
      _
    $region43: #{tpu_custom_call.1} parent=1 // pred_check_branch
      %253 = sbr.rel (0) target = $region45
    $region44: #{tpu_custom_call.1} parent=1 // pred_region
      %s255 = ssub.s32 128, 128
      %256 = vsyncadd [#allocation5], %s255
      %s258 = sshll.u32 [#allocation9], 4
      %s259 = int_to_ptr.vmem [resolvable:$true] %s258
      %261 = dma.vmem_to_hbm [thread:$0]  %s259, 128, %s5, [#allocation5]
    $region45: #{tpu_custom_call.1} parent=1 // pred_fallthru
      _
    // Predicated region
    $region46: #{tpu_custom_call.1} parent=1 // pred_check
      _
    $region47: #{tpu_custom_call.1} parent=1 // pred_check_branch
      %263 = sbr.rel (0) target = $region49
    $region48: #{tpu_custom_call.1} parent=1 // pred_region
      %264 = dma.done [#allocation5], 128
    $region49: #{tpu_custom_call.1} parent=1 // pred_fallthru
      _
    %265 = vsyncpa [#allocation4], 1
    %266 = vsyncpa [#allocation7], 1
    %267 = vsyncpa [#allocation5], 1

</llo_original>
